<compile_context>
chip_gen: v7x
topology: tpu7x:2x2x1
jax: 0.10.0
libtpu: 0.0.40
codegen_flags: <defaults>
</compile_context>

<pallas_src>
import functools

import jax
import jax.numpy as jnp
from jax.experimental import pallas as pl
from jax.experimental.pallas import tpu as pltpu


def _node_rk4_kernel(x_ref, w1_ref, b1_ref, w2_ref, b2_ref, w3_ref, b3_ref,
                     o_ref, *, dt):
    """One RK4(3/8) step of the 3-layer MLP vector field on a (TB, D) tile."""
    # Hoist weights/biases out of the 4 MLP evaluations.
    w1 = w1_ref[...]  # bf16, (D, H)
    w2 = w2_ref[...]  # bf16, (H, H)
    w3 = w3_ref[...]  # bf16, (H, D)
    b1 = b1_ref[...]  # f32, (1, H)
    b2 = b2_ref[...]  # f32, (1, H)
    b3 = b3_ref[...]  # f32, (1, D)

    def mlp(y):
        h = jnp.tanh(
            jnp.dot(y.astype(jnp.bfloat16), w1,
                    preferred_element_type=jnp.float32) + b1)
        h = jnp.tanh(
            jnp.dot(h.astype(jnp.bfloat16), w2,
                    preferred_element_type=jnp.float32) + b2)
        return jnp.dot(h.astype(jnp.bfloat16), w3,
                       preferred_element_type=jnp.float32) + b3

    x = x_ref[...].astype(jnp.float32)

    # Folded scalar constants: one multiply per array on the serial chain.
    dt_third = dt / 3.0
    dt_eighth = dt * 0.125

    k1 = mlp(x)
    k2 = mlp(x + dt_third * k1)
    k3 = mlp(x + dt * k2 - dt_third * k1)
    k4 = mlp(x + dt * (k1 - k2 + k3))

    # NOTE: with D < 128 this is a masked partial store; acceptable since the
    # kernel is matmul/latency-dominated, not store-bound.
    o_ref[...] = (x + dt_eighth * (k1 + 3.0 * (k2 + k3) + k4)).astype(o_ref.dtype)


def node_forward(x, params, *, t0=0.0, t1=1.0, block_b=512):
    """x: (B, D) float32. params: w1,b1,w2,b2,w3,b3 with weights stored (in, out)."""
    B, D = x.shape
    H = params["w1"].shape[1]
    dt = float(t1 - t0)

    # Batch tile: largest multiple-of-8 divisor of B up to block_b (big tiles
    # amortize the ~0.35us/step grid overhead and fill MXU rows); fall back to
    # the whole batch when B isn't a multiple of 8 (full-dim block is legal).
    if B % 8 == 0:
        tb = 8
        while tb * 2 <= min(B, block_b) and B % (tb * 2) == 0:
            tb *= 2
    else:
        tb = B
    grid = (B // tb,)

    # MXU-native bf16 weights (halves weight DMA + VMEM residency — matters on
    # v7x's 64 MiB VMEM); biases stay f32 so the add/tanh path is pure f32.
    w1 = params["w1"].astype(jnp.bfloat16)
    w2 = params["w2"].astype(jnp.bfloat16)
    w3 = params["w3"].astype(jnp.bfloat16)
    b1 = params["b1"].astype(jnp.float32)
    b2 = params["b2"].astype(jnp.float32)
    b3 = params["b3"].astype(jnp.float32)

    # Advisory cost for XLA's scheduler around the custom call.
    flops = 4 * 2 * B * (D * H + H * H + H * D)       # 4 MLP calls, 3 matmuls each
    transcendentals = 4 * 2 * B * H                   # 2 tanh layers per call
    bytes_accessed = (2 * B * D * 4                   # x in + out (f32)
                      + (D * H + H * H + H * D) * 2   # bf16 weights
                      + (2 * H + D) * 4)              # f32 biases

    x_spec = pl.BlockSpec((tb, D), lambda i: (i, 0))
    const = lambda shape: pl.BlockSpec(shape, lambda i: (0, 0))  # resident weights

    kernel = functools.partial(_node_rk4_kernel, dt=dt)
    return pl.pallas_call(
        kernel,
        out_shape=jax.ShapeDtypeStruct((B, D), x.dtype),
        grid=grid,
        in_specs=[
            x_spec,                        # x        (pipelined over batch)
            const((D, H)), const((1, H)),  # layer 1  (DMA'd once, stay in VMEM)
            const((H, H)), const((1, H)),  # layer 2
            const((H, D)), const((1, D)),  # layer 3
        ],
        out_specs=pl.BlockSpec((tb, D), lambda i: (i, 0)),
        compiler_params=pltpu.CompilerParams(
            # Independent batch tiles -> shard across both v7x TensorCores.
            dimension_semantics=("parallel",),
            # Safe on all generations (v7x physical VMEM is 64 MiB).
            vmem_limit_bytes=32 << 20,
        ),
        cost_estimate=pl.CostEstimate(
            flops=flops,
            transcendentals=transcendentals,
            bytes_accessed=bytes_accessed),
    )(x, w1, b1, w2, b2, w3, b3)


def init_params(key, input_dim, hidden_dim):
    """Deterministic synthetic init (uniform, PyTorch-Linear-like bounds)."""
    ks = jax.random.split(key, 6)

    def lin(kw, kb, fan_in, fan_out):
        bound = 1.0 / float(fan_in) ** 0.5
        w = jax.random.uniform(kw, (fan_in, fan_out), jnp.float32, -bound, bound)
        b = jax.random.uniform(kb, (1, fan_out), jnp.float32, -bound, bound)
        return w, b

    w1, b1 = lin(ks[0], ks[1], input_dim, hidden_dim)
    w2, b2 = lin(ks[2], ks[3], hidden_dim, hidden_dim)
    w3, b3 = lin(ks[4], ks[5], hidden_dim, input_dim)
    return dict(w1=w1, b1=b1, w2=w2, b2=b2, w3=w3, b3=b3)


def node_forward_ref(x, params, *, dt=1.0, bf16_matmul=True):
    """Plain-JAX reference of the same RK4(3/8) step (optionally bf16 matmuls)."""
    cast = (lambda a: a.astype(jnp.bfloat16)) if bf16_matmul else (lambda a: a)

    def mlp(y):
        h = jnp.tanh(jnp.dot(cast(y), cast(params["w1"]),
                             preferred_element_type=jnp.float32) + params["b1"])
        h = jnp.tanh(jnp.dot(cast(h), cast(params["w2"]),
                             preferred_element_type=jnp.float32) + params["b2"])
        return jnp.dot(cast(h), cast(params["w3"]),
                       preferred_element_type=jnp.float32) + params["b3"]

    dt_third = dt / 3.0
    k1 = mlp(x)
    k2 = mlp(x + dt_third * k1)
    k3 = mlp(x + dt * k2 - dt_third * k1)
    k4 = mlp(x + dt * (k1 - k2 + k3))
    return x + (dt * 0.125) * (k1 + 3.0 * (k2 + k3) + k4)


if __name__ == "__main__":
    # NODE(input_dim=16, hidden_dim=32, num_layers=3), batch=8
    B, D, H = 8, 16, 32
    key = jax.random.PRNGKey(0)
    kx, kp = jax.random.split(key)

    x = jax.random.normal(kx, (B, D), dtype=jnp.float32)
    params = init_params(kp, D, H)

    out = jax.block_until_ready(node_forward(x, params))

    ref_bf16 = node_forward_ref(x, params, bf16_matmul=True)   # mirrors kernel math
    ref_f32 = node_forward_ref(x, params, bf16_matmul=False)   # full-f32 semantics
    assert out.shape == (B, D)
    assert jnp.allclose(out, ref_bf16, atol=3e-3, rtol=3e-3), "mismatch vs bf16 reference"
    assert jnp.allclose(out, ref_f32, atol=5e-2, rtol=5e-2), "mismatch vs f32 reference"

    print("KERNEL_OK")
</pallas_src>

<mosaic_0001>
module attributes {stable_mosaic.version = 11 : i64} {
  func.func @_node_rk4_kernel(%arg0: i32, %arg1: memref<8x16xf32, #tpu.memory_space<vmem>>, %arg2: memref<16x32xbf16, #tpu.memory_space<vmem>>, %arg3: memref<1x32xf32, #tpu.memory_space<vmem>>, %arg4: memref<32x32xbf16, #tpu.memory_space<vmem>>, %arg5: memref<1x32xf32, #tpu.memory_space<vmem>>, %arg6: memref<32x16xbf16, #tpu.memory_space<vmem>>, %arg7: memref<1x16xf32, #tpu.memory_space<vmem>>, %arg8: memref<8x16xf32, #tpu.memory_space<vmem>>) attributes {dimension_semantics = [#tpu.dimension_semantics<parallel>], iteration_bounds = array<i64: 1>, scalar_prefetch = 0 : i64, scratch_operands = 0 : i64, tpu.core_type = #tpu.core_type<tc>, window_params = [{transform_indices = @transform_0, window_bounds = array<i64: 8, 16>}, {pipeline_mode = #tpu.pipeline_mode<synchronous>, transform_indices = @transform_1, window_bounds = array<i64: 16, 32>}, {pipeline_mode = #tpu.pipeline_mode<synchronous>, transform_indices = @transform_2, window_bounds = array<i64: 1, 32>}, {pipeline_mode = #tpu.pipeline_mode<synchronous>, transform_indices = @transform_3, window_bounds = array<i64: 32, 32>}, {pipeline_mode = #tpu.pipeline_mode<synchronous>, transform_indices = @transform_4, window_bounds = array<i64: 1, 32>}, {pipeline_mode = #tpu.pipeline_mode<synchronous>, transform_indices = @transform_5, window_bounds = array<i64: 32, 16>}, {pipeline_mode = #tpu.pipeline_mode<synchronous>, transform_indices = @transform_6, window_bounds = array<i64: 1, 16>}, {transform_indices = @transform_7, window_bounds = array<i64: 8, 16>}]} {
    %c0 = arith.constant 0 : index
    %c0_0 = arith.constant 0 : index
    %0 = vector.load %arg2[%c0, %c0_0] : memref<16x32xbf16, #tpu.memory_space<vmem>>, vector<16x32xbf16>
    %c0_1 = arith.constant 0 : index
    %c0_2 = arith.constant 0 : index
    %1 = vector.load %arg4[%c0_1, %c0_2] : memref<32x32xbf16, #tpu.memory_space<vmem>>, vector<32x32xbf16>
    %c0_3 = arith.constant 0 : index
    %c0_4 = arith.constant 0 : index
    %2 = vector.load %arg6[%c0_3, %c0_4] : memref<32x16xbf16, #tpu.memory_space<vmem>>, vector<32x16xbf16>
    %c0_5 = arith.constant 0 : index
    %c0_6 = arith.constant 0 : index
    %3 = vector.load %arg3[%c0_5, %c0_6] : memref<1x32xf32, #tpu.memory_space<vmem>>, vector<1x32xf32>
    %c0_7 = arith.constant 0 : index
    %c0_8 = arith.constant 0 : index
    %4 = vector.load %arg5[%c0_7, %c0_8] : memref<1x32xf32, #tpu.memory_space<vmem>>, vector<1x32xf32>
    %c0_9 = arith.constant 0 : index
    %c0_10 = arith.constant 0 : index
    %5 = vector.load %arg7[%c0_9, %c0_10] : memref<1x16xf32, #tpu.memory_space<vmem>>, vector<1x16xf32>
    %c0_11 = arith.constant 0 : index
    %c0_12 = arith.constant 0 : index
    %6 = vector.load %arg1[%c0_11, %c0_12] : memref<8x16xf32, #tpu.memory_space<vmem>>, vector<8x16xf32>
    %7 = arith.truncf %6 : vector<8x16xf32> to vector<8x16xbf16>
    %cst = arith.constant dense<0.000000e+00> : vector<8x32xf32>
    %8 = tpu.matmul %7, %0, %cst {dimension_numbers = #tpu.dot_dimension_numbers<[1], [0], [0], [1], [0, 0, 1, 1], [], []>} : vector<8x16xbf16>, vector<16x32xbf16>, vector<8x32xf32> -> vector<8x32xf32>
    %9 = vector.broadcast %3 : vector<1x32xf32> to vector<8x32xf32>
    %10 = arith.addf %8, %9 : vector<8x32xf32>
    %11 = math.tanh %10 : vector<8x32xf32>
    %12 = arith.truncf %11 : vector<8x32xf32> to vector<8x32xbf16>
    %cst_13 = arith.constant dense<0.000000e+00> : vector<8x32xf32>
    %13 = tpu.matmul %12, %1, %cst_13 {dimension_numbers = #tpu.dot_dimension_numbers<[1], [0], [0], [1], [0, 0, 1, 1], [], []>} : vector<8x32xbf16>, vector<32x32xbf16>, vector<8x32xf32> -> vector<8x32xf32>
    %14 = vector.broadcast %4 : vector<1x32xf32> to vector<8x32xf32>
    %15 = arith.addf %13, %14 : vector<8x32xf32>
    %16 = math.tanh %15 : vector<8x32xf32>
    %17 = arith.truncf %16 : vector<8x32xf32> to vector<8x32xbf16>
    %cst_14 = arith.constant dense<0.000000e+00> : vector<8x16xf32>
    %18 = tpu.matmul %17, %2, %cst_14 {dimension_numbers = #tpu.dot_dimension_numbers<[1], [0], [0], [1], [0, 0, 1, 1], [], []>} : vector<8x32xbf16>, vector<32x16xbf16>, vector<8x16xf32> -> vector<8x16xf32>
    %19 = vector.broadcast %5 : vector<1x16xf32> to vector<8x16xf32>
    %20 = arith.addf %18, %19 : vector<8x16xf32>
    %cst_15 = arith.constant 0.333333343 : f32
    %21 = vector.broadcast %cst_15 : f32 to vector<8x16xf32>
    %22 = arith.mulf %21, %20 : vector<8x16xf32>
    %23 = arith.addf %6, %22 : vector<8x16xf32>
    %24 = arith.truncf %23 : vector<8x16xf32> to vector<8x16xbf16>
    %cst_16 = arith.constant dense<0.000000e+00> : vector<8x32xf32>
    %25 = tpu.matmul %24, %0, %cst_16 {dimension_numbers = #tpu.dot_dimension_numbers<[1], [0], [0], [1], [0, 0, 1, 1], [], []>} : vector<8x16xbf16>, vector<16x32xbf16>, vector<8x32xf32> -> vector<8x32xf32>
    %26 = vector.broadcast %3 : vector<1x32xf32> to vector<8x32xf32>
    %27 = arith.addf %25, %26 : vector<8x32xf32>
    %28 = math.tanh %27 : vector<8x32xf32>
    %29 = arith.truncf %28 : vector<8x32xf32> to vector<8x32xbf16>
    %cst_17 = arith.constant dense<0.000000e+00> : vector<8x32xf32>
    %30 = tpu.matmul %29, %1, %cst_17 {dimension_numbers = #tpu.dot_dimension_numbers<[1], [0], [0], [1], [0, 0, 1, 1], [], []>} : vector<8x32xbf16>, vector<32x32xbf16>, vector<8x32xf32> -> vector<8x32xf32>
    %31 = vector.broadcast %4 : vector<1x32xf32> to vector<8x32xf32>
    %32 = arith.addf %30, %31 : vector<8x32xf32>
    %33 = math.tanh %32 : vector<8x32xf32>
    %34 = arith.truncf %33 : vector<8x32xf32> to vector<8x32xbf16>
    %cst_18 = arith.constant dense<0.000000e+00> : vector<8x16xf32>
    %35 = tpu.matmul %34, %2, %cst_18 {dimension_numbers = #tpu.dot_dimension_numbers<[1], [0], [0], [1], [0, 0, 1, 1], [], []>} : vector<8x32xbf16>, vector<32x16xbf16>, vector<8x16xf32> -> vector<8x16xf32>
    %36 = vector.broadcast %5 : vector<1x16xf32> to vector<8x16xf32>
    %37 = arith.addf %35, %36 : vector<8x16xf32>
    %cst_19 = arith.constant 1.000000e+00 : f32
    %38 = vector.broadcast %cst_19 : f32 to vector<8x16xf32>
    %39 = arith.mulf %38, %37 : vector<8x16xf32>
    %40 = arith.addf %6, %39 : vector<8x16xf32>
    %cst_20 = arith.constant 0.333333343 : f32
    %41 = vector.broadcast %cst_20 : f32 to vector<8x16xf32>
    %42 = arith.mulf %41, %20 : vector<8x16xf32>
    %43 = arith.subf %40, %42 : vector<8x16xf32>
    %44 = arith.truncf %43 : vector<8x16xf32> to vector<8x16xbf16>
    %cst_21 = arith.constant dense<0.000000e+00> : vector<8x32xf32>
    %45 = tpu.matmul %44, %0, %cst_21 {dimension_numbers = #tpu.dot_dimension_numbers<[1], [0], [0], [1], [0, 0, 1, 1], [], []>} : vector<8x16xbf16>, vector<16x32xbf16>, vector<8x32xf32> -> vector<8x32xf32>
    %46 = vector.broadcast %3 : vector<1x32xf32> to vector<8x32xf32>
    %47 = arith.addf %45, %46 : vector<8x32xf32>
    %48 = math.tanh %47 : vector<8x32xf32>
    %49 = arith.truncf %48 : vector<8x32xf32> to vector<8x32xbf16>
    %cst_22 = arith.constant dense<0.000000e+00> : vector<8x32xf32>
    %50 = tpu.matmul %49, %1, %cst_22 {dimension_numbers = #tpu.dot_dimension_numbers<[1], [0], [0], [1], [0, 0, 1, 1], [], []>} : vector<8x32xbf16>, vector<32x32xbf16>, vector<8x32xf32> -> vector<8x32xf32>
    %51 = vector.broadcast %4 : vector<1x32xf32> to vector<8x32xf32>
    %52 = arith.addf %50, %51 : vector<8x32xf32>
    %53 = math.tanh %52 : vector<8x32xf32>
    %54 = arith.truncf %53 : vector<8x32xf32> to vector<8x32xbf16>
    %cst_23 = arith.constant dense<0.000000e+00> : vector<8x16xf32>
    %55 = tpu.matmul %54, %2, %cst_23 {dimension_numbers = #tpu.dot_dimension_numbers<[1], [0], [0], [1], [0, 0, 1, 1], [], []>} : vector<8x32xbf16>, vector<32x16xbf16>, vector<8x16xf32> -> vector<8x16xf32>
    %56 = vector.broadcast %5 : vector<1x16xf32> to vector<8x16xf32>
    %57 = arith.addf %55, %56 : vector<8x16xf32>
    %58 = arith.subf %20, %37 : vector<8x16xf32>
    %59 = arith.addf %58, %57 : vector<8x16xf32>
    %cst_24 = arith.constant 1.000000e+00 : f32
    %60 = vector.broadcast %cst_24 : f32 to vector<8x16xf32>
    %61 = arith.mulf %60, %59 : vector<8x16xf32>
    %62 = arith.addf %6, %61 : vector<8x16xf32>
    %63 = arith.truncf %62 : vector<8x16xf32> to vector<8x16xbf16>
    %cst_25 = arith.constant dense<0.000000e+00> : vector<8x32xf32>
    %64 = tpu.matmul %63, %0, %cst_25 {dimension_numbers = #tpu.dot_dimension_numbers<[1], [0], [0], [1], [0, 0, 1, 1], [], []>} : vector<8x16xbf16>, vector<16x32xbf16>, vector<8x32xf32> -> vector<8x32xf32>
    %65 = vector.broadcast %3 : vector<1x32xf32> to vector<8x32xf32>
    %66 = arith.addf %64, %65 : vector<8x32xf32>
    %67 = math.tanh %66 : vector<8x32xf32>
    %68 = arith.truncf %67 : vector<8x32xf32> to vector<8x32xbf16>
    %cst_26 = arith.constant dense<0.000000e+00> : vector<8x32xf32>
    %69 = tpu.matmul %68, %1, %cst_26 {dimension_numbers = #tpu.dot_dimension_numbers<[1], [0], [0], [1], [0, 0, 1, 1], [], []>} : vector<8x32xbf16>, vector<32x32xbf16>, vector<8x32xf32> -> vector<8x32xf32>
    %70 = vector.broadcast %4 : vector<1x32xf32> to vector<8x32xf32>
    %71 = arith.addf %69, %70 : vector<8x32xf32>
    %72 = math.tanh %71 : vector<8x32xf32>
    %73 = arith.truncf %72 : vector<8x32xf32> to vector<8x32xbf16>
    %cst_27 = arith.constant dense<0.000000e+00> : vector<8x16xf32>
    %74 = tpu.matmul %73, %2, %cst_27 {dimension_numbers = #tpu.dot_dimension_numbers<[1], [0], [0], [1], [0, 0, 1, 1], [], []>} : vector<8x32xbf16>, vector<32x16xbf16>, vector<8x16xf32> -> vector<8x16xf32>
    %75 = vector.broadcast %5 : vector<1x16xf32> to vector<8x16xf32>
    %76 = arith.addf %74, %75 : vector<8x16xf32>
    %77 = arith.addf %37, %57 : vector<8x16xf32>
    %cst_28 = arith.constant 3.000000e+00 : f32
    %78 = vector.broadcast %cst_28 : f32 to vector<8x16xf32>
    %79 = arith.mulf %78, %77 : vector<8x16xf32>
    %80 = arith.addf %20, %79 : vector<8x16xf32>
    %81 = arith.addf %80, %76 : vector<8x16xf32>
    %cst_29 = arith.constant 1.250000e-01 : f32
    %82 = vector.broadcast %cst_29 : f32 to vector<8x16xf32>
    %83 = arith.mulf %82, %81 : vector<8x16xf32>
    %84 = arith.addf %6, %83 : vector<8x16xf32>
    %c0_30 = arith.constant 0 : index
    %c0_31 = arith.constant 0 : index
    %85 = vector.load %arg8[%c0_30, %c0_31] : memref<8x16xf32, #tpu.memory_space<vmem>>, vector<8x16xf32>
    tpu.vector_store %arg8[%c0_30, %c0_31], %84 {strides = array<i32>} : memref<8x16xf32, #tpu.memory_space<vmem>>, vector<8x16xf32>,
    return
  }
  func.func @transform_0(%arg0: i32) -> (i32, i32) {
    %c0_i32 = arith.constant 0 : i32
    %c0_i32_0 = arith.constant 0 : i32
    return %arg0, %c0_i32 : i32, i32
  }
  func.func @transform_1(%arg0: i32) -> (i32, i32) {
    %c0_i32 = arith.constant 0 : i32
    %c0_i32_0 = arith.constant 0 : i32
    %c0_i32_1 = arith.constant 0 : i32
    return %c0_i32, %c0_i32_0 : i32, i32
  }
  func.func @transform_2(%arg0: i32) -> (i32, i32) {
    %c0_i32 = arith.constant 0 : i32
    %c0_i32_0 = arith.constant 0 : i32
    %c0_i32_1 = arith.constant 0 : i32
    return %c0_i32, %c0_i32_0 : i32, i32
  }
  func.func @transform_3(%arg0: i32) -> (i32, i32) {
    %c0_i32 = arith.constant 0 : i32
    %c0_i32_0 = arith.constant 0 : i32
    %c0_i32_1 = arith.constant 0 : i32
    return %c0_i32, %c0_i32_0 : i32, i32
  }
  func.func @transform_4(%arg0: i32) -> (i32, i32) {
    %c0_i32 = arith.constant 0 : i32
    %c0_i32_0 = arith.constant 0 : i32
    %c0_i32_1 = arith.constant 0 : i32
    return %c0_i32, %c0_i32_0 : i32, i32
  }
  func.func @transform_5(%arg0: i32) -> (i32, i32) {
    %c0_i32 = arith.constant 0 : i32
    %c0_i32_0 = arith.constant 0 : i32
    %c0_i32_1 = arith.constant 0 : i32
    return %c0_i32, %c0_i32_0 : i32, i32
  }
  func.func @transform_6(%arg0: i32) -> (i32, i32) {
    %c0_i32 = arith.constant 0 : i32
    %c0_i32_0 = arith.constant 0 : i32
    %c0_i32_1 = arith.constant 0 : i32
    return %c0_i32, %c0_i32_0 : i32, i32
  }
  func.func @transform_7(%arg0: i32) -> (i32, i32) {
    %c0_i32 = arith.constant 0 : i32
    %c0_i32_0 = arith.constant 0 : i32
    return %arg0, %c0_i32 : i32, i32
  }
}

</mosaic_0001>

<llo_original>
// kernel: tpu_custom_call.1
$region0: #{tpu_custom_call.1}
  #allocation0 [shape = 'u32[]', space=smem, size = 0x4, offset = 0x4, fixed_abs, tag = 'smem constant byte address 0x4 - core index']
  #allocation1 [shape = 'u32[144,128]{1,0:T(1,128)}', space=vmem, size = 0x12000, scoped, tag = 'internal scratch']
  %s0 = inlined_call_operand.vmem [shape: f32[8,16], index: 0, kind: input, shape index: {}]
  %s1 = inlined_call_operand.hbm [shape: bf16[16,32], index: 1, kind: input, shape index: {}]
  %s2 = inlined_call_operand.vmem [shape: f32[1,32], index: 2, kind: input, shape index: {}]
  %s3 = inlined_call_operand.vmem [shape: bf16[32,32], index: 3, kind: input, shape index: {}]
  %s4 = inlined_call_operand.vmem [shape: f32[1,32], index: 4, kind: input, shape index: {}]
  %s5 = inlined_call_operand.vmem [shape: bf16[32,16], index: 5, kind: input, shape index: {}]
  %s6 = inlined_call_operand.vmem [shape: f32[1,16], index: 6, kind: input, shape index: {}]
  %s7 = inlined_call_operand.hbm [shape: f32[8,16], index: 7, kind: output, shape index: {}]
  %s8 = sld [smem:[#allocation0]]
  $region42: #{tpu_custom_call.1} parent=0
    _
  %s10 = ssub.s32 1, %s8
  %s11 = scalar_select 0, %s10, %s8
  $region1: #{tpu_custom_call.1} parent=0
    #allocation2 [shape = 'u8[4096]{0}', space=vmem, size = 0x1000, scoped, tag = 'input window, operand 1, single buffered']
    #allocation3 [shape = 's32[1]{0}', space=sflag, size = 0x4, scoped, tag = 'scoped memory for tpu_custom_call.1']
    #allocation4 [shape = 's32[1]{0}', space=sflag, size = 0x4, scoped, tag = 'scoped memory for tpu_custom_call.1']
    #allocation5 [shape = 'u8[4096]{0}', space=vmem, size = 0x1000, scoped, tag = 'output window, operand 0, single buffered']
    %12 = vsyncpa [#allocation3], 0
    %13 = vsyncpa [#allocation4], 0
    // Predicated region
    $region2: #{tpu_custom_call.1} parent=1 // pred_check
      _
    $region3: #{tpu_custom_call.1} parent=1 // pred_check_branch
      %15 = sbr.rel (0) target = $region5
    $region4: #{tpu_custom_call.1} parent=1 // pred_region
      _
    $region5: #{tpu_custom_call.1} parent=1 // pred_fallthru
      _
    // Predicated region
    $region6: #{tpu_custom_call.1} parent=1 // pred_check
      _
    $region7: #{tpu_custom_call.1} parent=1 // pred_check_branch
      %17 = sbr.rel (0) target = $region9
    $region8: #{tpu_custom_call.1} parent=1 // pred_region
      %s19 = ssub.s32 128, 128
      %20 = vsyncadd [#allocation3], %s19
      %s21 = sshll.u32 [#allocation2], 4
      %s22 = int_to_ptr.vmem [resolvable:$true] %s21
      %27 = dma.hbm_to_vmem [thread:$0]  %s1, 128, %s22, [#allocation3], 64, 64, 4
    $region9: #{tpu_custom_call.1} parent=1 // pred_fallthru
      _
    // Predicated region
    $region10: #{tpu_custom_call.1} parent=1 // pred_check
      _
    $region11: #{tpu_custom_call.1} parent=1 // pred_check_branch
      %29 = sbr.rel (0) target = $region13
    $region12: #{tpu_custom_call.1} parent=1 // pred_region
      _
    $region13: #{tpu_custom_call.1} parent=1 // pred_fallthru
      _
    // Predicated region
    $region14: #{tpu_custom_call.1} parent=1 // pred_check
      _
    $region15: #{tpu_custom_call.1} parent=1 // pred_check_branch
      %31 = sbr.rel (0) target = $region17
    $region16: #{tpu_custom_call.1} parent=1 // pred_region
      _
    $region17: #{tpu_custom_call.1} parent=1 // pred_fallthru
      _
    // Predicated region
    $region18: #{tpu_custom_call.1} parent=1 // pred_check
      _
    $region19: #{tpu_custom_call.1} parent=1 // pred_check_branch
      %33 = sbr.rel (0) target = $region21
    $region20: #{tpu_custom_call.1} parent=1 // pred_region
      _
    $region21: #{tpu_custom_call.1} parent=1 // pred_fallthru
      _
    // Predicated region
    $region22: #{tpu_custom_call.1} parent=1 // pred_check
      _
    $region23: #{tpu_custom_call.1} parent=1 // pred_check_branch
      %35 = sbr.rel (0) target = $region25
    $region24: #{tpu_custom_call.1} parent=1 // pred_region
      _
    $region25: #{tpu_custom_call.1} parent=1 // pred_fallthru
      _
    // Predicated region
    $region26: #{tpu_custom_call.1} parent=1 // pred_check
      _
    $region27: #{tpu_custom_call.1} parent=1 // pred_check_branch
      %37 = sbr.rel (0) target = $region29
    $region28: #{tpu_custom_call.1} parent=1 // pred_region
      _
    $region29: #{tpu_custom_call.1} parent=1 // pred_fallthru
      _
    // Predicated region
    $region30: #{tpu_custom_call.1} parent=1 // pred_check
      _
    $region31: #{tpu_custom_call.1} parent=1 // pred_check_branch
      %39 = sbr.rel (0) target = $region33
    $region32: #{tpu_custom_call.1} parent=1 // pred_region
      %40 = dma.done [#allocation3], 128
    $region33: #{tpu_custom_call.1} parent=1 // pred_fallthru
      _
    %v42 = vld [vmem:[#allocation2] sm:$0xf]
    %v43 = vld [vmem:[#allocation2 + $0x4] sm:$0xf]
    %v44 = vld [vmem:[%s3] sm:$0xf]
    %v45 = vld [vmem:[%s3 + $0x4] sm:$0xf]
    %v46 = vld [vmem:[%s3 + $0x8] sm:$0xf]
    %v47 = vld [vmem:[%s3 + $0xc] sm:$0xf]
    %v48 = vld [vmem:[%s5] sm:$0xf]
    %v49 = vld [vmem:[%s5 + $0x4] sm:$0xf]
    %v50 = vld [vmem:[%s5 + $0x8] sm:$0xf]
    %v51 = vld [vmem:[%s5 + $0xc] sm:$0xf]
    %v52 = vld [vmem:[%s2] sm:$0x1]
    %v53 = vld [vmem:[%s4] sm:$0x1]
    %v54 = vld [vmem:[%s6] sm:$0x1]
    %v55 = vld [vmem:[%s0] sm:$0xff]
    %v56 = vpack.c.bf16 %v55, %v55
    %v58 = vlaneseq
    %v59 = vshrl.u32 %v58, 7
    %v60 = vsub.s32 0, %v59
    %v61 = vrot.slane %v52, %v60
    %v65 = vunpack.c.l.b16 %v42
    %v66 = vunpack.c.l.b16 %v43
    %v67 = vpack.c.b16 %v66, %v65
    %vm69 = vcmask 130048
    %v71 = vsel %vm69, %v56, 0
    %73 = vmatprep.subr.bf16.mxu0 0
    %74 = vmatpush1.bf16.msra.mxu0 %v67
    %75 = vmatprep.subr.bf16.mxu0 0
    %76 = vmatpush1.bf16.msra.mxu0 0
    %77 = vmatprep.subr.bf16.mxu0 0
    %78 = vmatpush1.bf16.msra.mxu0 0
    %79 = vmatprep.subr.bf16.mxu0 0
    %80 = vmatpush1.bf16.msra.mxu0 0
    %81 = vmatprep.subr.bf16.mxu0 0
    %82 = vmatpush1.bf16.msra.mxu0 0
    %83 = vmatprep.subr.bf16.mxu0 0
    %84 = vmatpush1.bf16.msra.mxu0 0
    %85 = vmatprep.subr.bf16.mxu0 0
    %86 = vmatpush1.bf16.msra.mxu0 0
    %87 = vmatprep.subr.bf16.mxu0 0
    %88 = vmatpush1.bf16.msra.mxu0 0
    %89 = vmatprep.subr.bf16.mxu0 0
    %90 = vmatpush1.bf16.msra.mxu0 0
    %91 = vmatprep.subr.bf16.mxu0 0
    %92 = vmatpush1.bf16.msra.mxu0 0
    %93 = vmatprep.subr.bf16.mxu0 0
    %94 = vmatpush1.bf16.msra.mxu0 0
    %95 = vmatprep.subr.bf16.mxu0 0
    %96 = vmatpush1.bf16.msra.mxu0 0
    %97 = vmatprep.subr.bf16.mxu0 0
    %98 = vmatpush1.bf16.msra.mxu0 0
    %99 = vmatprep.subr.bf16.mxu0 0
    %100 = vmatpush1.bf16.msra.mxu0 0
    %101 = vmatprep.subr.bf16.mxu0 0
    %102 = vmatpush1.bf16.msra.mxu0 0
    %103 = vmatprep.subr.bf16.mxu0 0
    %104 = vmatpush1.bf16.msra.mxu0 0
    %105 = vmatprep.mubr.bf16.mxu0 0
    %106 = vmatmul.mubr.bf16.gmra.mrb[0].mxu0 %v71
    %v107 = vpop.f32.mrb[0].mxu0
    %v108 = vadd.f32 %v61, %v107
    %v109 = vpop.f32.mrb[0].mxu0
    %v110 = vpop.f32.mrb[0].mxu0
    %v111 = vpop.f32.mrb[0].mxu0
    %112 = vdwg.mxu0
    %v113 = vtanh.pop %v108
    %v114 = vpack.c.bf16 %v113, %v113
    %v116 = vlaneseq
    %v117 = vshrl.u32 %v116, 7
    %v118 = vsub.s32 0, %v117
    %v119 = vrot.slane %v53, %v118
    %v125 = vunpack.c.l.b16 %v44
    %v126 = vunpack.c.l.b16 %v45
    %v127 = vunpack.c.l.b16 %v46
    %v128 = vunpack.c.l.b16 %v47
    %v129 = vpack.c.b16 %v126, %v125
    %v130 = vpack.c.b16 %v128, %v127
    %vm133 = vcmask 261120
    %v135 = vsel %vm133, %v114, 0
    %137 = vmatprep.subr.bf16.mxu0 0
    %138 = vmatpush1.bf16.msra.mxu0 %v129
    %139 = vmatprep.subr.bf16.mxu0 0
    %140 = vmatpush1.bf16.msra.mxu0 %v130
    %141 = vmatprep.subr.bf16.mxu0 0
    %142 = vmatpush1.bf16.msra.mxu0 0
    %143 = vmatprep.subr.bf16.mxu0 0
    %144 = vmatpush1.bf16.msra.mxu0 0
    %145 = vmatprep.subr.bf16.mxu0 0
    %146 = vmatpush1.bf16.msra.mxu0 0
    %147 = vmatprep.subr.bf16.mxu0 0
    %148 = vmatpush1.bf16.msra.mxu0 0
    %149 = vmatprep.subr.bf16.mxu0 0
    %150 = vmatpush1.bf16.msra.mxu0 0
    %151 = vmatprep.subr.bf16.mxu0 0
    %152 = vmatpush1.bf16.msra.mxu0 0
    %153 = vmatprep.subr.bf16.mxu0 0
    %154 = vmatpush1.bf16.msra.mxu0 0
    %155 = vmatprep.subr.bf16.mxu0 0
    %156 = vmatpush1.bf16.msra.mxu0 0
    %157 = vmatprep.subr.bf16.mxu0 0
    %158 = vmatpush1.bf16.msra.mxu0 0
    %159 = vmatprep.subr.bf16.mxu0 0
    %160 = vmatpush1.bf16.msra.mxu0 0
    %161 = vmatprep.subr.bf16.mxu0 0
    %162 = vmatpush1.bf16.msra.mxu0 0
    %163 = vmatprep.subr.bf16.mxu0 0
    %164 = vmatpush1.bf16.msra.mxu0 0
    %165 = vmatprep.subr.bf16.mxu0 0
    %166 = vmatpush1.bf16.msra.mxu0 0
    %167 = vmatprep.subr.bf16.mxu0 0
    %168 = vmatpush1.bf16.msra.mxu0 0
    %169 = vmatprep.mubr.bf16.mxu0 0
    %170 = vmatmul.mubr.bf16.gmra.mrb[0].mxu0 %v135
    %v171 = vpop.f32.mrb[0].mxu0
    %v172 = vadd.f32 %v119, %v171
    %v173 = vpop.f32.mrb[0].mxu0
    %v174 = vpop.f32.mrb[0].mxu0
    %v175 = vpop.f32.mrb[0].mxu0
    %176 = vdwg.mxu0
    %v177 = vtanh.pop %v172
    %v178 = vpack.c.bf16 %v177, %v177
    %v180 = vlaneseq
    %v181 = vshrl.u32 %v180, 7
    %v182 = vsub.s32 0, %v181
    %v183 = vrot.slane %v54, %v182
    %v189 = vunpack.c.l.b16 %v48
    %v190 = vunpack.c.l.b16 %v49
    %v191 = vunpack.c.l.b16 %v50
    %v192 = vunpack.c.l.b16 %v51
    %v193 = vpack.c.b16 %v190, %v189
    %v194 = vpack.c.b16 %v192, %v191
    %v198 = vsel %vm133, %v178, 0
    %200 = vmatprep.subr.bf16.mxu0 0
    %201 = vmatpush1.bf16.msra.mxu0 %v193
    %202 = vmatprep.subr.bf16.mxu0 0
    %203 = vmatpush1.bf16.msra.mxu0 %v194
    %204 = vmatprep.subr.bf16.mxu0 0
    %205 = vmatpush1.bf16.msra.mxu0 0
    %206 = vmatprep.subr.bf16.mxu0 0
    %207 = vmatpush1.bf16.msra.mxu0 0
    %208 = vmatprep.subr.bf16.mxu0 0
    %209 = vmatpush1.bf16.msra.mxu0 0
    %210 = vmatprep.subr.bf16.mxu0 0
    %211 = vmatpush1.bf16.msra.mxu0 0
    %212 = vmatprep.subr.bf16.mxu0 0
    %213 = vmatpush1.bf16.msra.mxu0 0
    %214 = vmatprep.subr.bf16.mxu0 0
    %215 = vmatpush1.bf16.msra.mxu0 0
    %216 = vmatprep.subr.bf16.mxu0 0
    %217 = vmatpush1.bf16.msra.mxu0 0
    %218 = vmatprep.subr.bf16.mxu0 0
    %219 = vmatpush1.bf16.msra.mxu0 0
    %220 = vmatprep.subr.bf16.mxu0 0
    %221 = vmatpush1.bf16.msra.mxu0 0
    %222 = vmatprep.subr.bf16.mxu0 0
    %223 = vmatpush1.bf16.msra.mxu0 0
    %224 = vmatprep.subr.bf16.mxu0 0
    %225 = vmatpush1.bf16.msra.mxu0 0
    %226 = vmatprep.subr.bf16.mxu0 0
    %227 = vmatpush1.bf16.msra.mxu0 0
    %228 = vmatprep.subr.bf16.mxu0 0
    %229 = vmatpush1.bf16.msra.mxu0 0
    %230 = vmatprep.subr.bf16.mxu0 0
    %231 = vmatpush1.bf16.msra.mxu0 0
    %232 = vmatprep.mubr.bf16.mxu0 0
    %233 = vmatmul.mubr.bf16.gmra.mrb[0].mxu0 %v198
    %v234 = vpop.f32.mrb[0].mxu0
    %v235 = vadd.f32 %v183, %v234
    %v236 = vpop.f32.mrb[0].mxu0
    %v237 = vpop.f32.mrb[0].mxu0
    %v238 = vpop.f32.mrb[0].mxu0
    %239 = vdwg.mxu0
    %v240 = vmul.f32 %v235, 0.33333334
    %v241 = vadd.f32 %v55, %v240
    %v242 = vpack.c.bf16 %v241, %v241
    %v244 = vsel %vm69, %v242, 0
    %246 = vmatprep.subr.bf16.mxu0 0
    %247 = vmatpush1.bf16.msra.mxu0 %v67
    %248 = vmatprep.subr.bf16.mxu0 0
    %249 = vmatpush1.bf16.msra.mxu0 0
    %250 = vmatprep.subr.bf16.mxu0 0
    %251 = vmatpush1.bf16.msra.mxu0 0
    %252 = vmatprep.subr.bf16.mxu0 0
    %253 = vmatpush1.bf16.msra.mxu0 0
    %254 = vmatprep.subr.bf16.mxu0 0
    %255 = vmatpush1.bf16.msra.mxu0 0
    %256 = vmatprep.subr.bf16.mxu0 0
    %257 = vmatpush1.bf16.msra.mxu0 0
    %258 = vmatprep.subr.bf16.mxu0 0
    %259 = vmatpush1.bf16.msra.mxu0 0
    %260 = vmatprep.subr.bf16.mxu0 0
    %261 = vmatpush1.bf16.msra.mxu0 0
    %262 = vmatprep.subr.bf16.mxu0 0
    %263 = vmatpush1.bf16.msra.mxu0 0
    %264 = vmatprep.subr.bf16.mxu0 0
    %265 = vmatpush1.bf16.msra.mxu0 0
    %266 = vmatprep.subr.bf16.mxu0 0
    %267 = vmatpush1.bf16.msra.mxu0 0
    %268 = vmatprep.subr.bf16.mxu0 0
    %269 = vmatpush1.bf16.msra.mxu0 0
    %270 = vmatprep.subr.bf16.mxu0 0
    %271 = vmatpush1.bf16.msra.mxu0 0
    %272 = vmatprep.subr.bf16.mxu0 0
    %273 = vmatpush1.bf16.msra.mxu0 0
    %274 = vmatprep.subr.bf16.mxu0 0
    %275 = vmatpush1.bf16.msra.mxu0 0
    %276 = vmatprep.subr.bf16.mxu0 0
    %277 = vmatpush1.bf16.msra.mxu0 0
    %278 = vmatprep.mubr.bf16.mxu0 0
    %279 = vmatmul.mubr.bf16.gmra.mrb[0].mxu0 %v244
    %v280 = vpop.f32.mrb[0].mxu0
    %v281 = vadd.f32 %v61, %v280
    %v282 = vpop.f32.mrb[0].mxu0
    %v283 = vpop.f32.mrb[0].mxu0
    %v284 = vpop.f32.mrb[0].mxu0
    %285 = vdwg.mxu0
    %v286 = vtanh.pop %v281
    %v287 = vpack.c.bf16 %v286, %v286
    %v289 = vsel %vm133, %v287, 0
    %291 = vmatprep.subr.bf16.mxu0 0
    %292 = vmatpush1.bf16.msra.mxu0 %v129
    %293 = vmatprep.subr.bf16.mxu0 0
    %294 = vmatpush1.bf16.msra.mxu0 %v130
    %295 = vmatprep.subr.bf16.mxu0 0
    %296 = vmatpush1.bf16.msra.mxu0 0
    %297 = vmatprep.subr.bf16.mxu0 0
    %298 = vmatpush1.bf16.msra.mxu0 0
    %299 = vmatprep.subr.bf16.mxu0 0
    %300 = vmatpush1.bf16.msra.mxu0 0
    %301 = vmatprep.subr.bf16.mxu0 0
    %302 = vmatpush1.bf16.msra.mxu0 0
    %303 = vmatprep.subr.bf16.mxu0 0
    %304 = vmatpush1.bf16.msra.mxu0 0
    %305 = vmatprep.subr.bf16.mxu0 0
    %306 = vmatpush1.bf16.msra.mxu0 0
    %307 = vmatprep.subr.bf16.mxu0 0
    %308 = vmatpush1.bf16.msra.mxu0 0
    %309 = vmatprep.subr.bf16.mxu0 0
    %310 = vmatpush1.bf16.msra.mxu0 0
    %311 = vmatprep.subr.bf16.mxu0 0
    %312 = vmatpush1.bf16.msra.mxu0 0
    %313 = vmatprep.subr.bf16.mxu0 0
    %314 = vmatpush1.bf16.msra.mxu0 0
    %315 = vmatprep.subr.bf16.mxu0 0
    %316 = vmatpush1.bf16.msra.mxu0 0
    %317 = vmatprep.subr.bf16.mxu0 0
    %318 = vmatpush1.bf16.msra.mxu0 0
    %319 = vmatprep.subr.bf16.mxu0 0
    %320 = vmatpush1.bf16.msra.mxu0 0
    %321 = vmatprep.subr.bf16.mxu0 0
    %322 = vmatpush1.bf16.msra.mxu0 0
    %323 = vmatprep.mubr.bf16.mxu0 0
    %324 = vmatmul.mubr.bf16.gmra.mrb[0].mxu0 %v289
    %v325 = vpop.f32.mrb[0].mxu0
    %v326 = vadd.f32 %v119, %v325
    %v327 = vpop.f32.mrb[0].mxu0
    %v328 = vpop.f32.mrb[0].mxu0
    %v329 = vpop.f32.mrb[0].mxu0
    %330 = vdwg.mxu0
    %v331 = vtanh.pop %v326
    %v332 = vpack.c.bf16 %v331, %v331
    %v334 = vsel %vm133, %v332, 0
    %336 = vmatprep.subr.bf16.mxu0 0
    %337 = vmatpush1.bf16.msra.mxu0 %v193
    %338 = vmatprep.subr.bf16.mxu0 0
    %339 = vmatpush1.bf16.msra.mxu0 %v194
    %340 = vmatprep.subr.bf16.mxu0 0
    %341 = vmatpush1.bf16.msra.mxu0 0
    %342 = vmatprep.subr.bf16.mxu0 0
    %343 = vmatpush1.bf16.msra.mxu0 0
    %344 = vmatprep.subr.bf16.mxu0 0
    %345 = vmatpush1.bf16.msra.mxu0 0
    %346 = vmatprep.subr.bf16.mxu0 0
    %347 = vmatpush1.bf16.msra.mxu0 0
    %348 = vmatprep.subr.bf16.mxu0 0
    %349 = vmatpush1.bf16.msra.mxu0 0
    %350 = vmatprep.subr.bf16.mxu0 0
    %351 = vmatpush1.bf16.msra.mxu0 0
    %352 = vmatprep.subr.bf16.mxu0 0
    %353 = vmatpush1.bf16.msra.mxu0 0
    %354 = vmatprep.subr.bf16.mxu0 0
    %355 = vmatpush1.bf16.msra.mxu0 0
    %356 = vmatprep.subr.bf16.mxu0 0
    %357 = vmatpush1.bf16.msra.mxu0 0
    %358 = vmatprep.subr.bf16.mxu0 0
    %359 = vmatpush1.bf16.msra.mxu0 0
    %360 = vmatprep.subr.bf16.mxu0 0
    %361 = vmatpush1.bf16.msra.mxu0 0
    %362 = vmatprep.subr.bf16.mxu0 0
    %363 = vmatpush1.bf16.msra.mxu0 0
    %364 = vmatprep.subr.bf16.mxu0 0
    %365 = vmatpush1.bf16.msra.mxu0 0
    %366 = vmatprep.subr.bf16.mxu0 0
    %367 = vmatpush1.bf16.msra.mxu0 0
    %368 = vmatprep.mubr.bf16.mxu0 0
    %369 = vmatmul.mubr.bf16.gmra.mrb[0].mxu0 %v334
    %v370 = vpop.f32.mrb[0].mxu0
    %v371 = vadd.f32 %v183, %v370
    %v372 = vpop.f32.mrb[0].mxu0
    %v373 = vpop.f32.mrb[0].mxu0
    %v374 = vpop.f32.mrb[0].mxu0
    %375 = vdwg.mxu0
    %v376 = vadd.f32 %v55, %v371
    %v377 = vsub.f32 %v376, %v240
    %v378 = vpack.c.bf16 %v377, %v377
    %v380 = vsel %vm69, %v378, 0
    %382 = vmatprep.subr.bf16.mxu0 0
    %383 = vmatpush1.bf16.msra.mxu0 %v67
    %384 = vmatprep.subr.bf16.mxu0 0
    %385 = vmatpush1.bf16.msra.mxu0 0
    %386 = vmatprep.subr.bf16.mxu0 0
    %387 = vmatpush1.bf16.msra.mxu0 0
    %388 = vmatprep.subr.bf16.mxu0 0
    %389 = vmatpush1.bf16.msra.mxu0 0
    %390 = vmatprep.subr.bf16.mxu0 0
    %391 = vmatpush1.bf16.msra.mxu0 0
    %392 = vmatprep.subr.bf16.mxu0 0
    %393 = vmatpush1.bf16.msra.mxu0 0
    %394 = vmatprep.subr.bf16.mxu0 0
    %395 = vmatpush1.bf16.msra.mxu0 0
    %396 = vmatprep.subr.bf16.mxu0 0
    %397 = vmatpush1.bf16.msra.mxu0 0
    %398 = vmatprep.subr.bf16.mxu0 0
    %399 = vmatpush1.bf16.msra.mxu0 0
    %400 = vmatprep.subr.bf16.mxu0 0
    %401 = vmatpush1.bf16.msra.mxu0 0
    %402 = vmatprep.subr.bf16.mxu0 0
    %403 = vmatpush1.bf16.msra.mxu0 0
    %404 = vmatprep.subr.bf16.mxu0 0
    %405 = vmatpush1.bf16.msra.mxu0 0
    %406 = vmatprep.subr.bf16.mxu0 0
    %407 = vmatpush1.bf16.msra.mxu0 0
    %408 = vmatprep.subr.bf16.mxu0 0
    %409 = vmatpush1.bf16.msra.mxu0 0
    %410 = vmatprep.subr.bf16.mxu0 0
    %411 = vmatpush1.bf16.msra.mxu0 0
    %412 = vmatprep.subr.bf16.mxu0 0
    %413 = vmatpush1.bf16.msra.mxu0 0
    %414 = vmatprep.mubr.bf16.mxu0 0
    %415 = vmatmul.mubr.bf16.gmra.mrb[0].mxu0 %v380
    %v416 = vpop.f32.mrb[0].mxu0
    %v417 = vadd.f32 %v61, %v416
    %v418 = vpop.f32.mrb[0].mxu0
    %v419 = vpop.f32.mrb[0].mxu0
    %v420 = vpop.f32.mrb[0].mxu0
    %421 = vdwg.mxu0
    %v422 = vtanh.pop %v417
    %v423 = vpack.c.bf16 %v422, %v422
    %v425 = vsel %vm133, %v423, 0
    %427 = vmatprep.subr.bf16.mxu0 0
    %428 = vmatpush1.bf16.msra.mxu0 %v129
    %429 = vmatprep.subr.bf16.mxu0 0
    %430 = vmatpush1.bf16.msra.mxu0 %v130
    %431 = vmatprep.subr.bf16.mxu0 0
    %432 = vmatpush1.bf16.msra.mxu0 0
    %433 = vmatprep.subr.bf16.mxu0 0
    %434 = vmatpush1.bf16.msra.mxu0 0
    %435 = vmatprep.subr.bf16.mxu0 0
    %436 = vmatpush1.bf16.msra.mxu0 0
    %437 = vmatprep.subr.bf16.mxu0 0
    %438 = vmatpush1.bf16.msra.mxu0 0
    %439 = vmatprep.subr.bf16.mxu0 0
    %440 = vmatpush1.bf16.msra.mxu0 0
    %441 = vmatprep.subr.bf16.mxu0 0
    %442 = vmatpush1.bf16.msra.mxu0 0
    %443 = vmatprep.subr.bf16.mxu0 0
    %444 = vmatpush1.bf16.msra.mxu0 0
    %445 = vmatprep.subr.bf16.mxu0 0
    %446 = vmatpush1.bf16.msra.mxu0 0
    %447 = vmatprep.subr.bf16.mxu0 0
    %448 = vmatpush1.bf16.msra.mxu0 0
    %449 = vmatprep.subr.bf16.mxu0 0
    %450 = vmatpush1.bf16.msra.mxu0 0
    %451 = vmatprep.subr.bf16.mxu0 0
    %452 = vmatpush1.bf16.msra.mxu0 0
    %453 = vmatprep.subr.bf16.mxu0 0
    %454 = vmatpush1.bf16.msra.mxu0 0
    %455 = vmatprep.subr.bf16.mxu0 0
    %456 = vmatpush1.bf16.msra.mxu0 0
    %457 = vmatprep.subr.bf16.mxu0 0
    %458 = vmatpush1.bf16.msra.mxu0 0
    %459 = vmatprep.mubr.bf16.mxu0 0
    %460 = vmatmul.mubr.bf16.gmra.mrb[0].mxu0 %v425
    %v461 = vpop.f32.mrb[0].mxu0
    %v462 = vadd.f32 %v119, %v461
    %v463 = vpop.f32.mrb[0].mxu0
    %v464 = vpop.f32.mrb[0].mxu0
    %v465 = vpop.f32.mrb[0].mxu0
    %466 = vdwg.mxu0
    %v467 = vtanh.pop %v462
    %v468 = vpack.c.bf16 %v467, %v467
    %v470 = vsel %vm133, %v468, 0
    %472 = vmatprep.subr.bf16.mxu0 0
    %473 = vmatpush1.bf16.msra.mxu0 %v193
    %474 = vmatprep.subr.bf16.mxu0 0
    %475 = vmatpush1.bf16.msra.mxu0 %v194
    %476 = vmatprep.subr.bf16.mxu0 0
    %477 = vmatpush1.bf16.msra.mxu0 0
    %478 = vmatprep.subr.bf16.mxu0 0
    %479 = vmatpush1.bf16.msra.mxu0 0
    %480 = vmatprep.subr.bf16.mxu0 0
    %481 = vmatpush1.bf16.msra.mxu0 0
    %482 = vmatprep.subr.bf16.mxu0 0
    %483 = vmatpush1.bf16.msra.mxu0 0
    %484 = vmatprep.subr.bf16.mxu0 0
    %485 = vmatpush1.bf16.msra.mxu0 0
    %486 = vmatprep.subr.bf16.mxu0 0
    %487 = vmatpush1.bf16.msra.mxu0 0
    %488 = vmatprep.subr.bf16.mxu0 0
    %489 = vmatpush1.bf16.msra.mxu0 0
    %490 = vmatprep.subr.bf16.mxu0 0
    %491 = vmatpush1.bf16.msra.mxu0 0
    %492 = vmatprep.subr.bf16.mxu0 0
    %493 = vmatpush1.bf16.msra.mxu0 0
    %494 = vmatprep.subr.bf16.mxu0 0
    %495 = vmatpush1.bf16.msra.mxu0 0
    %496 = vmatprep.subr.bf16.mxu0 0
    %497 = vmatpush1.bf16.msra.mxu0 0
    %498 = vmatprep.subr.bf16.mxu0 0
    %499 = vmatpush1.bf16.msra.mxu0 0
    %500 = vmatprep.subr.bf16.mxu0 0
    %501 = vmatpush1.bf16.msra.mxu0 0
    %502 = vmatprep.subr.bf16.mxu0 0
    %503 = vmatpush1.bf16.msra.mxu0 0
    %504 = vmatprep.mubr.bf16.mxu0 0
    %505 = vmatmul.mubr.bf16.gmra.mrb[0].mxu0 %v470
    %v506 = vpop.f32.mrb[0].mxu0
    %v507 = vadd.f32 %v183, %v506
    %v508 = vpop.f32.mrb[0].mxu0
    %v509 = vpop.f32.mrb[0].mxu0
    %v510 = vpop.f32.mrb[0].mxu0
    %511 = vdwg.mxu0
    %v512 = vsub.f32 %v235, %v371
    %v513 = vadd.f32 %v512, %v507
    %v514 = vadd.f32 %v55, %v513
    %v515 = vpack.c.bf16 %v514, %v514
    %v517 = vsel %vm69, %v515, 0
    %519 = vmatprep.subr.bf16.mxu0 0
    %520 = vmatpush1.bf16.msra.mxu0 %v67
    %521 = vmatprep.subr.bf16.mxu0 0
    %522 = vmatpush1.bf16.msra.mxu0 0
    %523 = vmatprep.subr.bf16.mxu0 0
    %524 = vmatpush1.bf16.msra.mxu0 0
    %525 = vmatprep.subr.bf16.mxu0 0
    %526 = vmatpush1.bf16.msra.mxu0 0
    %527 = vmatprep.subr.bf16.mxu0 0
    %528 = vmatpush1.bf16.msra.mxu0 0
    %529 = vmatprep.subr.bf16.mxu0 0
    %530 = vmatpush1.bf16.msra.mxu0 0
    %531 = vmatprep.subr.bf16.mxu0 0
    %532 = vmatpush1.bf16.msra.mxu0 0
    %533 = vmatprep.subr.bf16.mxu0 0
    %534 = vmatpush1.bf16.msra.mxu0 0
    %535 = vmatprep.subr.bf16.mxu0 0
    %536 = vmatpush1.bf16.msra.mxu0 0
    %537 = vmatprep.subr.bf16.mxu0 0
    %538 = vmatpush1.bf16.msra.mxu0 0
    %539 = vmatprep.subr.bf16.mxu0 0
    %540 = vmatpush1.bf16.msra.mxu0 0
    %541 = vmatprep.subr.bf16.mxu0 0
    %542 = vmatpush1.bf16.msra.mxu0 0
    %543 = vmatprep.subr.bf16.mxu0 0
    %544 = vmatpush1.bf16.msra.mxu0 0
    %545 = vmatprep.subr.bf16.mxu0 0
    %546 = vmatpush1.bf16.msra.mxu0 0
    %547 = vmatprep.subr.bf16.mxu0 0
    %548 = vmatpush1.bf16.msra.mxu0 0
    %549 = vmatprep.subr.bf16.mxu0 0
    %550 = vmatpush1.bf16.msra.mxu0 0
    %551 = vmatprep.mubr.bf16.mxu0 0
    %552 = vmatmul.mubr.bf16.gmra.mrb[0].mxu0 %v517
    %v553 = vpop.f32.mrb[0].mxu0
    %v554 = vadd.f32 %v61, %v553
    %v555 = vpop.f32.mrb[0].mxu0
    %v556 = vpop.f32.mrb[0].mxu0
    %v557 = vpop.f32.mrb[0].mxu0
    %558 = vdwg.mxu0
    %v559 = vtanh.pop %v554
    %v560 = vpack.c.bf16 %v559, %v559
    %v562 = vsel %vm133, %v560, 0
    %564 = vmatprep.subr.bf16.mxu0 0
    %565 = vmatpush1.bf16.msra.mxu0 %v129
    %566 = vmatprep.subr.bf16.mxu0 0
    %567 = vmatpush1.bf16.msra.mxu0 %v130
    %568 = vmatprep.subr.bf16.mxu0 0
    %569 = vmatpush1.bf16.msra.mxu0 0
    %570 = vmatprep.subr.bf16.mxu0 0
    %571 = vmatpush1.bf16.msra.mxu0 0
    %572 = vmatprep.subr.bf16.mxu0 0
    %573 = vmatpush1.bf16.msra.mxu0 0
    %574 = vmatprep.subr.bf16.mxu0 0
    %575 = vmatpush1.bf16.msra.mxu0 0
    %576 = vmatprep.subr.bf16.mxu0 0
    %577 = vmatpush1.bf16.msra.mxu0 0
    %578 = vmatprep.subr.bf16.mxu0 0
    %579 = vmatpush1.bf16.msra.mxu0 0
    %580 = vmatprep.subr.bf16.mxu0 0
    %581 = vmatpush1.bf16.msra.mxu0 0
    %582 = vmatprep.subr.bf16.mxu0 0
    %583 = vmatpush1.bf16.msra.mxu0 0
    %584 = vmatprep.subr.bf16.mxu0 0
    %585 = vmatpush1.bf16.msra.mxu0 0
    %586 = vmatprep.subr.bf16.mxu0 0
    %587 = vmatpush1.bf16.msra.mxu0 0
    %588 = vmatprep.subr.bf16.mxu0 0
    %589 = vmatpush1.bf16.msra.mxu0 0
    %590 = vmatprep.subr.bf16.mxu0 0
    %591 = vmatpush1.bf16.msra.mxu0 0
    %592 = vmatprep.subr.bf16.mxu0 0
    %593 = vmatpush1.bf16.msra.mxu0 0
    %594 = vmatprep.subr.bf16.mxu0 0
    %595 = vmatpush1.bf16.msra.mxu0 0
    %596 = vmatprep.mubr.bf16.mxu0 0
    %597 = vmatmul.mubr.bf16.gmra.mrb[0].mxu0 %v562
    %v598 = vpop.f32.mrb[0].mxu0
    %v599 = vadd.f32 %v119, %v598
    %v600 = vpop.f32.mrb[0].mxu0
    %v601 = vpop.f32.mrb[0].mxu0
    %v602 = vpop.f32.mrb[0].mxu0
    %603 = vdwg.mxu0
    %v604 = vtanh.pop %v599
    %v605 = vpack.c.bf16 %v604, %v604
    %v607 = vsel %vm133, %v605, 0
    %609 = vmatprep.subr.bf16.mxu0 0
    %610 = vmatpush1.bf16.msra.mxu0 %v193
    %611 = vmatprep.subr.bf16.mxu0 0
    %612 = vmatpush1.bf16.msra.mxu0 %v194
    %613 = vmatprep.subr.bf16.mxu0 0
    %614 = vmatpush1.bf16.msra.mxu0 0
    %615 = vmatprep.subr.bf16.mxu0 0
    %616 = vmatpush1.bf16.msra.mxu0 0
    %617 = vmatprep.subr.bf16.mxu0 0
    %618 = vmatpush1.bf16.msra.mxu0 0
    %619 = vmatprep.subr.bf16.mxu0 0
    %620 = vmatpush1.bf16.msra.mxu0 0
    %621 = vmatprep.subr.bf16.mxu0 0
    %622 = vmatpush1.bf16.msra.mxu0 0
    %623 = vmatprep.subr.bf16.mxu0 0
    %624 = vmatpush1.bf16.msra.mxu0 0
    %625 = vmatprep.subr.bf16.mxu0 0
    %626 = vmatpush1.bf16.msra.mxu0 0
    %627 = vmatprep.subr.bf16.mxu0 0
    %628 = vmatpush1.bf16.msra.mxu0 0
    %629 = vmatprep.subr.bf16.mxu0 0
    %630 = vmatpush1.bf16.msra.mxu0 0
    %631 = vmatprep.subr.bf16.mxu0 0
    %632 = vmatpush1.bf16.msra.mxu0 0
    %633 = vmatprep.subr.bf16.mxu0 0
    %634 = vmatpush1.bf16.msra.mxu0 0
    %635 = vmatprep.subr.bf16.mxu0 0
    %636 = vmatpush1.bf16.msra.mxu0 0
    %637 = vmatprep.subr.bf16.mxu0 0
    %638 = vmatpush1.bf16.msra.mxu0 0
    %639 = vmatprep.subr.bf16.mxu0 0
    %640 = vmatpush1.bf16.msra.mxu0 0
    %641 = vmatprep.mubr.bf16.mxu0 0
    %642 = vmatmul.mubr.bf16.gmra.mrb[0].mxu0 %v607
    %v643 = vpop.f32.mrb[0].mxu0
    %v644 = vadd.f32 %v183, %v643
    %v645 = vpop.f32.mrb[0].mxu0
    %v646 = vpop.f32.mrb[0].mxu0
    %v647 = vpop.f32.mrb[0].mxu0
    %648 = vdwg.mxu0
    %v649 = vadd.f32 %v371, %v507
    %v650 = vmul.f32 %v649, 3.0
    %v651 = vadd.f32 %v235, %v650
    %v652 = vadd.f32 %v651, %v644
    %v653 = vmul.f32 %v652, 0.125
    %v654 = vadd.f32 %v55, %v653
    %655 = vst.msk [vmem:[#allocation5] sm:$0xff] %vm69, %v654
    // Predicated region
    $region34: #{tpu_custom_call.1} parent=1 // pred_check
      _
    $region35: #{tpu_custom_call.1} parent=1 // pred_check_branch
      %657 = sbr.rel (0) target = $region37
    $region36: #{tpu_custom_call.1} parent=1 // pred_region
      %s659 = ssub.s32 128, 128
      %660 = vsyncadd [#allocation4], %s659
      %s662 = sshll.u32 [#allocation5], 4
      %s663 = int_to_ptr.vmem [resolvable:$true] %s662
      %665 = dma.vmem_to_hbm [thread:$0]  %s663, 128, %s7, [#allocation4]
    $region37: #{tpu_custom_call.1} parent=1 // pred_fallthru
      _
    // Predicated region
    $region38: #{tpu_custom_call.1} parent=1 // pred_check
      _
    $region39: #{tpu_custom_call.1} parent=1 // pred_check_branch
      %667 = sbr.rel (0) target = $region41
    $region40: #{tpu_custom_call.1} parent=1 // pred_region
      %668 = dma.done [#allocation4], 128
    $region41: #{tpu_custom_call.1} parent=1 // pred_fallthru
      _
    %669 = vsyncpa [#allocation3], 1
    %670 = vsyncpa [#allocation4], 1

</llo_original>
